<compile_context>
chip_gen: v6e
topology: v6e:2x2x1
jax: 0.10.0
libtpu: 0.0.40
codegen_flags: <defaults>
</compile_context>

<pallas_src>
import jax
import jax.numpy as jnp
from jax.experimental import pallas as pl
from jax.experimental.pallas import tpu as pltpu

NUM_NODES = 4
NUM_OPS = 3  # ['none', 'skip_connect', 'conv_1x1']
_HIGH = jax.lax.Precision.HIGHEST


def _edge2index(num_nodes):
    keys = []
    for i in range(1, num_nodes):
        for j in range(i):
            keys.append('{:}<-{:}'.format(i, j))
    edge_keys = sorted(keys)          # matches sorted(self._mixed_ops.keys())
    return {k: idx for idx, k in enumerate(edge_keys)}, len(edge_keys)


# ----------------------------- kernels --------------------------------------

def _cell_kernel_mxu(a_ref, b_ref, x_ref, o_ref):
    """out_tile = A_fold @ x_tile + c_fold  (single MXU contraction)."""
    y = jnp.dot(a_ref[...], x_ref[...].astype(jnp.float32),
                preferred_element_type=jnp.float32, precision=_HIGH)
    o_ref[...] = (y + b_ref[...]).astype(o_ref.dtype)


def _cell_kernel_vpu(a_ref, b_ref, x_ref, o_ref):
    """Small-C path: C broadcast-FMAs on the VPU (skips MXU push/drain)."""
    a = a_ref[...]                               # (C, C)  tiny, lives in vregs
    x = x_ref[...].astype(jnp.float32)           # (C, tm) lane-dense tile
    c = a.shape[0]
    acc = b_ref[...] + a[:, 0:1] * x[0:1, :]     # (C,1)*(1,tm) -> (C,tm)
    for k in range(1, c):                        # static unroll, C is small
        acc = acc + a[:, k:k + 1] * x[k:k + 1, :]
    o_ref[...] = acc.astype(o_ref.dtype)


# ----------------------------- wrapper ---------------------------------------

def cell_forward(x_nchw, alphas, conv_w, conv_b, *, num_nodes=NUM_NODES,
                 tm_max=1024):
    """x_nchw: (N, C, H, W).  Returns (N, C, H, W)."""
    N, C, H, W = x_nchw.shape
    edge2index, num_edges = _edge2index(num_nodes)
    assert alphas.shape == (num_edges, NUM_OPS)
    f32 = jnp.float32

    # ---- fold softmax + the entire linear DAG into one (C,C) transform -----
    # per-edge (lane-dense / transposed) contribution:
    #   contrib(i<-j) = (w_skip*I + w_conv*W_e^T) @ h_j^T + w_conv*b_e
    # compose along the DAG:  node_i^T = A_i @ x^T + c_i
    w_mix = jax.nn.softmax(alphas.astype(f32), axis=-1)                   # (E, K)
    eye = jnp.eye(C, dtype=f32)
    w_edge = (w_mix[:, 1, None, None] * eye
              + w_mix[:, 2, None, None]
              * jnp.swapaxes(conv_w.astype(f32), 1, 2))                   # (E, C, C)
    b_edge = w_mix[:, 2, None] * conv_b[:, 0, :].astype(f32)              # (E, C)

    A = [eye]
    c = [jnp.zeros((C,), f32)]
    for i in range(1, num_nodes):
        Ai = jnp.zeros((C, C), f32)
        ci = jnp.zeros((C,), f32)
        for j in range(i):
            e = edge2index['{:}<-{:}'.format(i, j)]
            Ai = Ai + jnp.dot(w_edge[e], A[j], precision=_HIGH)
            ci = ci + jnp.dot(w_edge[e], c[j], precision=_HIGH) + b_edge[e]
        A.append(Ai)
        c.append(ci)
    a_fold = A[num_nodes - 1]                    # (C, C)
    c_fold = c[num_nodes - 1][:, None]           # (C, 1)

    # ---- layout: NCHW -> (N, C, HW); reshape is free, no transpose ---------
    HW = H * W
    x3 = x_nchw.reshape(N, C, HW)

    hw128 = -(-HW // 128) * 128                  # lane dim rounded to 128
    tm = min(int(tm_max), hw128)
    tm = -(-tm // 128) * 128
    hw_pad = -(-hw128 // tm) * tm
    if hw_pad != HW:                             # only copies when HW % 128 != 0
        x3 = jnp.pad(x3, ((0, 0), (0, 0), (0, hw_pad - HW)))

    kernel = _cell_kernel_vpu if C <= 16 else _cell_kernel_mxu

    # VMEM budget: double-buffered in + out tiles plus the tiny folded weights.
    need = 2 * 2 * C * tm * 4 + 2 * (C * C + C) * 4
    vmem_limit = int(min(max(need + (4 << 20), 32 << 20), 96 << 20))

    out3 = pl.pallas_call(
        kernel,
        out_shape=jax.ShapeDtypeStruct((N, C, hw_pad), x_nchw.dtype),
        grid_spec=pltpu.PrefetchScalarGridSpec(
            num_scalar_prefetch=0,
            grid=(N, hw_pad // tm),
            in_specs=[
                # folded (transposed) DAG transform — constant across the grid
                pl.BlockSpec((C, C), lambda n, i: (0, 0)),
                # folded bias — constant across the grid
                pl.BlockSpec((C, 1), lambda n, i: (0, 0)),
                # one image's channel slab, lane-dense spatial tile
                pl.BlockSpec((None, C, tm), lambda n, i: (n, 0, i)),
            ],
            out_specs=pl.BlockSpec((None, C, tm), lambda n, i: (n, 0, i)),
        ),
        compiler_params=pltpu.CompilerParams(
            dimension_semantics=("parallel", "parallel"),
            vmem_limit_bytes=vmem_limit),
    )(a_fold, c_fold, x3)

    return out3[:, :, :HW].reshape(N, C, H, W)


# ----------------------------- reference -------------------------------------

def cell_forward_ref(x_nchw, alphas, conv_w, conv_b, *, num_nodes=NUM_NODES):
    """Pure-JAX reference (un-folded, per-edge blend) for verification."""
    N, C, H, W = x_nchw.shape
    edge2index, _ = _edge2index(num_nodes)
    x_flat = jnp.transpose(x_nchw, (0, 2, 3, 1)).reshape(-1, C).astype(jnp.float32)
    w_mix = jax.nn.softmax(alphas.astype(jnp.float32), axis=-1)
    nodes = [x_flat]
    for i in range(1, num_nodes):
        acc = jnp.zeros_like(x_flat)
        for j in range(i):
            e = edge2index['{:}<-{:}'.format(i, j)]
            h = nodes[j]
            conv = jnp.dot(h, conv_w[e].astype(jnp.float32), precision=_HIGH) \
                   + conv_b[e, 0].astype(jnp.float32)
            acc = acc + w_mix[e, 1] * h + w_mix[e, 2] * conv
        nodes.append(acc)
    out = nodes[num_nodes - 1].astype(x_nchw.dtype)
    return jnp.transpose(out.reshape(N, H, W, C), (0, 3, 1, 2))


if __name__ == "__main__":
    key = jax.random.PRNGKey(0)
    k_x, k_a, k_w, k_b = jax.random.split(key, 4)

    N, C, H, W = 2, 4, 16, 16
    _, num_edges = _edge2index(NUM_NODES)

    x = jax.random.normal(k_x, (N, C, H, W), dtype=jnp.float32)
    # nn.Parameter(0.001 * torch.randn(num_edges, num_ops))
    alphas = 0.001 * jax.random.normal(k_a, (num_edges, NUM_OPS), dtype=jnp.float32)
    # deterministic weights for the 1x1-conv candidate op on every edge
    conv_w = 0.1 * jax.random.normal(k_w, (num_edges, C, C), dtype=jnp.float32)
    conv_b = 0.1 * jax.random.normal(k_b, (num_edges, 1, C), dtype=jnp.float32)

    out = cell_forward(x, alphas, conv_w, conv_b)
    out = jax.block_until_ready(out)

    ref = cell_forward_ref(x, alphas, conv_w, conv_b)
    assert out.shape == (N, C, H, W)
    assert jnp.allclose(out, ref, atol=1e-4, rtol=1e-4), "mismatch vs JAX reference"

    print("KERNEL_OK")
</pallas_src>

<mosaic_0001>
module attributes {stable_mosaic.version = 11 : i64} {
  func.func @_cell_kernel_vpu(%arg0: i32, %arg1: i32, %arg2: memref<4x4xf32, #tpu.memory_space<vmem>>, %arg3: memref<4x1xf32, #tpu.memory_space<vmem>>, %arg4: memref<1x4x256xf32, #tpu.memory_space<vmem>>, %arg5: memref<1x4x256xf32, #tpu.memory_space<vmem>>) attributes {dimension_semantics = [#tpu.dimension_semantics<parallel>, #tpu.dimension_semantics<parallel>], iteration_bounds = array<i64: 2, 1>, scalar_prefetch = 0 : i64, scratch_operands = 0 : i64, tpu.core_type = #tpu.core_type<tc>, window_params = [{pipeline_mode = #tpu.pipeline_mode<synchronous>, transform_indices = @transform_0, window_bounds = array<i64: 4, 4>}, {pipeline_mode = #tpu.pipeline_mode<synchronous>, transform_indices = @transform_1, window_bounds = array<i64: 4, 1>}, {transform_indices = @transform_2, window_bounds = array<i64: 1, 4, 256>}, {transform_indices = @transform_3, window_bounds = array<i64: 1, 4, 256>}]} {
    %c0 = arith.constant 0 : index
    %c0_0 = arith.constant 0 : index
    %0 = vector.load %arg2[%c0, %c0_0] : memref<4x4xf32, #tpu.memory_space<vmem>>, vector<4x4xf32>
    %c0_1 = arith.constant 0 : index
    %c0_2 = arith.constant 0 : index
    %c0_3 = arith.constant 0 : index
    %1 = vector.load %arg4[%c0_1, %c0_2, %c0_3] : memref<1x4x256xf32, #tpu.memory_space<vmem>>, vector<1x4x256xf32>
    %2 = vector.shape_cast %1 : vector<1x4x256xf32> to vector<4x256xf32>
    %c0_4 = arith.constant 0 : index
    %c0_5 = arith.constant 0 : index
    %3 = vector.load %arg3[%c0_4, %c0_5] : memref<4x1xf32, #tpu.memory_space<vmem>>, vector<4x1xf32>
    %4 = vector.extract_strided_slice %0 {offsets = [0, 0], sizes = [4, 1], strides = [1, 1]} : vector<4x4xf32> to vector<4x1xf32>
    %5 = vector.extract_strided_slice %2 {offsets = [0, 0], sizes = [1, 256], strides = [1, 1]} : vector<4x256xf32> to vector<1x256xf32>
    %6 = vector.broadcast %4 : vector<4x1xf32> to vector<4x256xf32>
    %7 = vector.broadcast %5 : vector<1x256xf32> to vector<4x256xf32>
    %8 = arith.mulf %6, %7 : vector<4x256xf32>
    %9 = vector.broadcast %3 : vector<4x1xf32> to vector<4x256xf32>
    %10 = arith.addf %9, %8 : vector<4x256xf32>
    %11 = vector.extract_strided_slice %0 {offsets = [0, 1], sizes = [4, 1], strides = [1, 1]} : vector<4x4xf32> to vector<4x1xf32>
    %12 = vector.extract_strided_slice %2 {offsets = [1, 0], sizes = [1, 256], strides = [1, 1]} : vector<4x256xf32> to vector<1x256xf32>
    %13 = vector.broadcast %11 : vector<4x1xf32> to vector<4x256xf32>
    %14 = vector.broadcast %12 : vector<1x256xf32> to vector<4x256xf32>
    %15 = arith.mulf %13, %14 : vector<4x256xf32>
    %16 = arith.addf %10, %15 : vector<4x256xf32>
    %17 = vector.extract_strided_slice %0 {offsets = [0, 2], sizes = [4, 1], strides = [1, 1]} : vector<4x4xf32> to vector<4x1xf32>
    %18 = vector.extract_strided_slice %2 {offsets = [2, 0], sizes = [1, 256], strides = [1, 1]} : vector<4x256xf32> to vector<1x256xf32>
    %19 = vector.broadcast %17 : vector<4x1xf32> to vector<4x256xf32>
    %20 = vector.broadcast %18 : vector<1x256xf32> to vector<4x256xf32>
    %21 = arith.mulf %19, %20 : vector<4x256xf32>
    %22 = arith.addf %16, %21 : vector<4x256xf32>
    %23 = vector.extract_strided_slice %0 {offsets = [0, 3], sizes = [4, 1], strides = [1, 1]} : vector<4x4xf32> to vector<4x1xf32>
    %24 = vector.extract_strided_slice %2 {offsets = [3, 0], sizes = [1, 256], strides = [1, 1]} : vector<4x256xf32> to vector<1x256xf32>
    %25 = vector.broadcast %23 : vector<4x1xf32> to vector<4x256xf32>
    %26 = vector.broadcast %24 : vector<1x256xf32> to vector<4x256xf32>
    %27 = arith.mulf %25, %26 : vector<4x256xf32>
    %28 = arith.addf %22, %27 : vector<4x256xf32>
    %c0_6 = arith.constant 0 : index
    %c0_7 = arith.constant 0 : index
    %c0_8 = arith.constant 0 : index
    %29 = vector.load %arg5[%c0_6, %c0_7, %c0_8] : memref<1x4x256xf32, #tpu.memory_space<vmem>>, vector<1x4x256xf32>
    %30 = vector.shape_cast %29 : vector<1x4x256xf32> to vector<4x256xf32>
    %31 = vector.shape_cast %28 : vector<4x256xf32> to vector<1x4x256xf32>
    tpu.vector_store %arg5[%c0_6, %c0_7, %c0_8], %31 {strides = array<i32>} : memref<1x4x256xf32, #tpu.memory_space<vmem>>, vector<1x4x256xf32>,
    return
  }
  func.func @transform_0(%arg0: i32, %arg1: i32) -> (i32, i32) {
    %c0_i32 = arith.constant 0 : i32
    %c0_i32_0 = arith.constant 0 : i32
    %c0_i32_1 = arith.constant 0 : i32
    return %c0_i32, %c0_i32_0 : i32, i32
  }
  func.func @transform_1(%arg0: i32, %arg1: i32) -> (i32, i32) {
    %c0_i32 = arith.constant 0 : i32
    %c0_i32_0 = arith.constant 0 : i32
    %c0_i32_1 = arith.constant 0 : i32
    return %c0_i32, %c0_i32_0 : i32, i32
  }
  func.func @transform_2(%arg0: i32, %arg1: i32) -> (i32, i32, i32) {
    %c0_i32 = arith.constant 0 : i32
    %c0_i32_0 = arith.constant 0 : i32
    return %arg0, %c0_i32, %arg1 : i32, i32, i32
  }
  func.func @transform_3(%arg0: i32, %arg1: i32) -> (i32, i32, i32) {
    %c0_i32 = arith.constant 0 : i32
    %c0_i32_0 = arith.constant 0 : i32
    return %arg0, %c0_i32, %arg1 : i32, i32, i32
  }
}

</mosaic_0001>

<llo_original>
// kernel: tpu_custom_call.1
$region0: #{tpu_custom_call.1}
  #allocation0 [shape = 'u32[]', space=smem, size = 0x4, offset = 0x4, fixed_abs, tag = 'smem constant byte address 0x4 - core index']
  #allocation1 [shape = 'u32[144,128]{1,0:T(1,128)}', space=vmem, size = 0x12000, scoped, tag = 'internal scratch']
  %s0 = inlined_call_operand.vmem [shape: f32[4,4], index: 0, kind: input, shape index: {}]
  %s1 = inlined_call_operand.vmem [shape: f32[4,1], index: 1, kind: input, shape index: {}]
  %s2 = inlined_call_operand.hbm [shape: f32[2,4,256], index: 2, kind: input, shape index: {}]
  %s3 = inlined_call_operand.hbm [shape: f32[2,4,256], index: 3, kind: output, shape index: {}]
  %s4 = sld [smem:[#allocation0]]
  $region49: #{tpu_custom_call.1} parent=0
    _
  %s6 = ssub.s32 1, %s4
  %s7 = scalar_select 0, %s6, %s4
  $region1: #{tpu_custom_call.1} parent=0
    #allocation2 [shape = 'u8[8192]{0}', space=vmem, size = 0x2000, scoped, tag = 'input window, operand 2']
    #allocation3 [shape = 's32[2]{0}', space=sflag, size = 0x8, scoped, tag = 'scoped memory for tpu_custom_call.1']
    #allocation4 [shape = 's32[2]{0}', space=sflag, size = 0x8, scoped, tag = 'scoped memory for tpu_custom_call.1']
    #allocation5 [shape = 'u8[8192]{0}', space=vmem, size = 0x2000, scoped, tag = 'output window, operand 0']
    %8 = vsyncpa [#allocation3], 0
    %s9 = scalar_lea.sflag [#allocation3], 1
    %10 = vsyncpa %s9, 0
    %11 = vsyncpa [#allocation4], 0
    %s12 = scalar_lea.sflag [#allocation4], 1
    %13 = vsyncpa %s12, 0
    loop: start=0, step=1, limit=4
    $region2: #{tpu_custom_call.1} parent=1 // loop_pre_header
      _
    $region3: #{tpu_custom_call.1} parent=1 // loop_header
      %s15 = sphi 0, %s19
      %p16 = scmp.ge.s32.totalorder %s15, 4
      %s22 = sphi 0, %s34
      %s23 = sphi 0, %s30
      %s24 = sphi 0, %s22
      %s25 = sphi 0, %s23
      %s26 = sphi 0, %s24
      %s27 = sphi 0, %s25
      %s35 = sphi 0, %s35
      %s37 = sphi 0, %s35
      %s38 = sphi 0, %s37
      %s52 = sphi 0, %s38
      %s56 = sphi 0, %s56
      %s58 = sphi 0, %s56
      %s59 = sphi 0, %s58
      %s73 = sphi 0, %s59
      %s81 = sphi 0, %s83
      %s84 = sphi 0, %s81
      %s85 = sphi 0, %s84
      %s101 = sphi 0, %s85
      %s109 = sphi 0, %s111
      %s112 = sphi 0, %s109
      %s113 = sphi 0, %s112
      %s129 = sphi 0, %s113
    $region4: #{tpu_custom_call.1} parent=1 // loop_header_branch
      %18 = sbr.rel (%p16) target = $region8
    $region5: #{tpu_custom_call.1} parent=1 // loop_body
      %s20 = ssub.s32 %s15, 1
      %s21 = ssub.s32 %s15, 2
      %s28 = sadd.s32 1, %s23
      %p29 = scmp.ge.s32.totalorder %s28, 1
      %s30 = scalar_select %p29, 0, %s28
      %s31 = sadd.s32 1, %s22
      %s32 = scalar_select %p29, %s31, %s22
      %p33 = scmp.ge.s32.totalorder %s32, 2
      %s34 = scalar_select %p33, 0, %s32
      %s36 = sadd.s32 %s35, 1
      %p39 = scmp.eq.s32.totalorder %s15, 1
      %p40 = scmp.ne.s32.totalorder %s35, %s37
      %p41 = scmp.eq.s32.totalorder %s15, 0
      %p42 = por %p40, %p41
      %p43 = scmp.ne.s32.totalorder %s35, %s37
      %p44 = scmp.eq.s32.totalorder %s20, 1
      %p45 = por %p43, %p44
      %p46 = scmp.ne.s32.totalorder %s37, %s38
      %p47 = scmp.eq.s32.totalorder %s20, 0
      %p48 = por %p46, %p47
      %p49 = scmp.ne.s32.totalorder %s37, %s38
      %p50 = scmp.eq.s32.totalorder %s21, 1
      %p51 = por %p49, %p50
      %p53 = scmp.ne.s32.totalorder %s38, %s52
      %p54 = scmp.eq.s32.totalorder %s21, 0
      %p55 = por %p53, %p54
      %s57 = sadd.s32 %s56, 1
      %p60 = scmp.eq.s32.totalorder %s15, 1
      %p61 = scmp.ne.s32.totalorder %s56, %s58
      %p62 = scmp.eq.s32.totalorder %s15, 0
      %p63 = por %p61, %p62
      %p64 = scmp.ne.s32.totalorder %s56, %s58
      %p65 = scmp.eq.s32.totalorder %s20, 1
      %p66 = por %p64, %p65
      %p67 = scmp.ne.s32.totalorder %s58, %s59
      %p68 = scmp.eq.s32.totalorder %s20, 0
      %p69 = por %p67, %p68
      %p70 = scmp.ne.s32.totalorder %s58, %s59
      %p71 = scmp.eq.s32.totalorder %s21, 1
      %p72 = por %p70, %p71
      %p74 = scmp.ne.s32.totalorder %s59, %s73
      %p75 = scmp.eq.s32.totalorder %s21, 0
      %p76 = por %p74, %p75
      %s77 = ssub.s32 %s22, %s34
      %s78 = ssub.s32 %s23, %s30
      %s79 = sor.u32 %s77, %s78
      %p80 = scmp.eq.s32.totalorder %s79, 0
      %s82 = sadd.s32 %s81, 1
      %s83 = scalar_select %p80, %s81, %s82
      %p86 = pneg %p80
      %p87 = scmp.eq.s32.totalorder %s15, 1
      %p88 = por %p86, %p87
      %p89 = scmp.ne.s32.totalorder %s81, %s84
      %p90 = scmp.eq.s32.totalorder %s15, 0
      %p91 = por %p89, %p90
      %p92 = scmp.ne.s32.totalorder %s81, %s84
      %p93 = scmp.eq.s32.totalorder %s20, 1
      %p94 = por %p92, %p93
      %p95 = scmp.ne.s32.totalorder %s84, %s85
      %p96 = scmp.eq.s32.totalorder %s20, 0
      %p97 = por %p95, %p96
      %p98 = scmp.ne.s32.totalorder %s84, %s85
      %p99 = scmp.eq.s32.totalorder %s21, 1
      %p100 = por %p98, %p99
      %p102 = scmp.ne.s32.totalorder %s85, %s101
      %p103 = scmp.eq.s32.totalorder %s21, 0
      %p104 = por %p102, %p103
      %s105 = ssub.s32 %s22, %s34
      %s106 = ssub.s32 %s23, %s30
      %s107 = sor.u32 %s105, %s106
      %p108 = scmp.eq.s32.totalorder %s107, 0
      %s110 = sadd.s32 %s109, 1
      %s111 = scalar_select %p108, %s109, %s110
      %p114 = pneg %p108
      %p115 = scmp.eq.s32.totalorder %s15, 1
      %p116 = por %p114, %p115
      %p117 = scmp.ne.s32.totalorder %s109, %s112
      %p118 = scmp.eq.s32.totalorder %s15, 0
      %p119 = por %p117, %p118
      %p120 = scmp.ne.s32.totalorder %s109, %s112
      %p121 = scmp.eq.s32.totalorder %s20, 1
      %p122 = por %p120, %p121
      %p123 = scmp.ne.s32.totalorder %s112, %s113
      %p124 = scmp.eq.s32.totalorder %s20, 0
      %p125 = por %p123, %p124
      %p126 = scmp.ne.s32.totalorder %s112, %s113
      %p127 = scmp.eq.s32.totalorder %s21, 1
      %p128 = por %p126, %p127
      %p130 = scmp.ne.s32.totalorder %s113, %s129
      %p131 = scmp.eq.s32.totalorder %s21, 0
      %p132 = por %p130, %p131
      %p133 = scmp.le.s32.totalorder 1, %s15
      %p134 = scmp.lt.s32.totalorder %s15, 3
      %p135 = pnand %p133, %p134
      %p136 = pneg %p135
      // Predicated region
      $region9: #{tpu_custom_call.1} parent=5 // pred_check
        _
      $region10: #{tpu_custom_call.1} parent=5 // pred_check_branch
        %138 = sbr.rel (%p135) target = $region12
      $region11: #{tpu_custom_call.1} parent=5 // pred_region
        %s139 = ssub.s32 %s15, 1
        // Predicated region
        $region13: #{tpu_custom_call.1} parent=11 // pred_check
          %p140 = pneg %p48
        $region14: #{tpu_custom_call.1} parent=11 // pred_check_branch
          %142 = sbr.rel (%p140) target = $region16
        $region15: #{tpu_custom_call.1} parent=11 // pred_region
          _
        $region16: #{tpu_custom_call.1} parent=11 // pred_fallthru
          _
        // Predicated region
        $region17: #{tpu_custom_call.1} parent=11 // pred_check
          %p143 = pneg %p69
        $region18: #{tpu_custom_call.1} parent=11 // pred_check_branch
          %145 = sbr.rel (%p143) target = $region20
        $region19: #{tpu_custom_call.1} parent=11 // pred_region
          _
        $region20: #{tpu_custom_call.1} parent=11 // pred_fallthru
          _
      $region12: #{tpu_custom_call.1} parent=5 // pred_fallthru
        _
      %p146 = scmp.lt.s32.totalorder %s15, 2
      // Predicated region
      $region21: #{tpu_custom_call.1} parent=5 // pred_check
        %p147 = pneg %p146
      $region22: #{tpu_custom_call.1} parent=5 // pred_check_branch
        %149 = sbr.rel (%p147) target = $region24
      $region23: #{tpu_custom_call.1} parent=5 // pred_region
        // Predicated region
        $region25: #{tpu_custom_call.1} parent=23 // pred_check
          %p150 = pneg %p91
        $region26: #{tpu_custom_call.1} parent=23 // pred_check_branch
          %152 = sbr.rel (%p150) target = $region28
        $region27: #{tpu_custom_call.1} parent=23 // pred_region
          %s153 = sand.u32 %s81, 1
          %s154 = scalar_lea.sflag [#allocation3], %s153
          %s155 = sand.u32 %s81, 1
          %s156 = smul.addr %s155, 8
          %s157 = scalar_lea.vmem [#allocation2], %s156
          %s158 = smul.u32 2, %s23
          %s160 = ssub.s32 128, 128
          %161 = vsyncadd %s154, %s160
          %s162 = smul.addr %s22, 2
          %s163 = sadd.s32 %s158, %s162
          %s164 = smul.addr %s163, 64
          %s165 = scalar_lea.hbm %s2, %s164
          %s167 = sshll.u32 %s157, 4
          %s168 = int_to_ptr.vmem [resolvable:$true] %s167
          %170 = dma.hbm_to_vmem [thread:$0]  %s165, 128, %s168, %s154
        $region28: #{tpu_custom_call.1} parent=23 // pred_fallthru
          _
      $region24: #{tpu_custom_call.1} parent=5 // pred_fallthru
        _
      %p171 = scmp.le.s32.totalorder 1, %s15
      %p172 = scmp.lt.s32.totalorder %s15, 3
      %p173 = pnand %p171, %p172
      %p174 = pneg %p173
      // Predicated region
      $region29: #{tpu_custom_call.1} parent=5 // pred_check
        _
      $region30: #{tpu_custom_call.1} parent=5 // pred_check_branch
        %176 = sbr.rel (%p173) target = $region32
      $region31: #{tpu_custom_call.1} parent=5 // pred_region
        %s177 = ssub.s32 %s15, 1
        %s178 = sand.u32 %s84, 1
        %s179 = scalar_lea.sflag [#allocation3], %s178
        %s180 = sand.u32 %s84, 1
        %s181 = smul.addr %s180, 8
        %s182 = scalar_lea.vmem [#allocation2], %s181
        // Predicated region
        $region33: #{tpu_custom_call.1} parent=31 // pred_check
          %p183 = pneg %p97
        $region34: #{tpu_custom_call.1} parent=31 // pred_check_branch
          %185 = sbr.rel (%p183) target = $region36
        $region35: #{tpu_custom_call.1} parent=31 // pred_region
          %186 = dma.done %s179, 128
        $region36: #{tpu_custom_call.1} parent=31 // pred_fallthru
          _
        %p187 = pneg %p48
        %p188 = pneg %p45
        %p189 = pneg %p69
        %p190 = pneg %p66
        %s191 = sand.u32 %s84, 1
        %s192 = scalar_lea.sflag [#allocation3], %s191
        %s193 = sand.u32 %s84, 1
        %s194 = smul.addr %s193, 8
        %s195 = scalar_lea.vmem [#allocation2], %s194
        %p196 = pneg %p97
        %p197 = pneg %p94
        %p198 = pneg %p125
        %p199 = pneg %p122
        %s200 = sand.u32 %s112, 1
        %s201 = scalar_lea.sflag [#allocation4], %s200
        %s202 = sand.u32 %s112, 1
        %s203 = smul.addr %s202, 8
        %s204 = scalar_lea.vmem [#allocation5], %s203
        %s205 = smul.u32 2, %s25
        %s206 = smul.u32 2, %s25
        %v207 = vld [vmem:[%s0] sm:$0xf]
        %v208 = vld [vmem:[%s182] sm:$0xff]
        %v209 = vld [vmem:[%s1] sm:$0xf]
        %211 = vset.pattern.permute.xlu0 0
        %212 = vperm.xlu0 %211, %v207
        %v213 = vpop.permute.xlu0 %212
        %v216 = vlaneseq
        %v217 = vshrl.u32 %v216, 7
        %v218 = vsub.s32 0, %v217
        %v219 = vrot.slane %v208, %v218
        %v220 = vlaneseq
        %v221 = vshrl.u32 %v220, 7
        %v222 = vsub.s32 4, %v221
        %v223 = vrot.slane %v208, %v222
        %v226 = vlaneseq
        %v227 = vshrl.u32 %v226, 7
        %v228 = vsub.s32 0, %v227
        %v229 = vrot.slane %v219, %v228
        %v230 = vlaneseq
        %v231 = vshrl.u32 %v230, 7
        %v232 = vsub.s32 0, %v231
        %v233 = vrot.slane %v223, %v232
        %v234 = vmul.f32 %v213, %v229
        %v235 = vmul.f32 %v213, %v233
        %237 = vset.pattern.permute.xlu0 0
        %238 = vperm.xlu0 %237, %v209
        %v239 = vpop.permute.xlu0 %238
        %v241 = vadd.f32 %v239, %v234
        %v242 = vadd.f32 %v239, %v235
        %243 = vset.pattern.permute.xlu0 1
        %244 = vperm.xlu0 %243, %v207
        %v245 = vpop.permute.xlu0 %244
        %v247 = vlaneseq
        %v248 = vshrl.u32 %v247, 7
        %v249 = vsub.s32 1, %v248
        %v250 = vrot.slane %v208, %v249
        %v251 = vlaneseq
        %v252 = vshrl.u32 %v251, 7
        %v253 = vsub.s32 5, %v252
        %v254 = vrot.slane %v208, %v253
        %v257 = vlaneseq
        %v258 = vshrl.u32 %v257, 7
        %v259 = vsub.s32 1, %v258
        %v260 = vrot.slane %v250, %v259
        %v261 = vlaneseq
        %v262 = vshrl.u32 %v261, 7
        %v263 = vsub.s32 1, %v262
        %v264 = vrot.slane %v254, %v263
        %v265 = vmul.f32 %v245, %v260
        %v266 = vmul.f32 %v245, %v264
        %v267 = vadd.f32 %v241, %v265
        %v268 = vadd.f32 %v242, %v266
        %269 = vset.pattern.permute.xlu0 2
        %270 = vperm.xlu0 %269, %v207
        %v271 = vpop.permute.xlu0 %270
        %v273 = vlaneseq
        %v274 = vshrl.u32 %v273, 7
        %v275 = vsub.s32 2, %v274
        %v276 = vrot.slane %v208, %v275
        %v277 = vlaneseq
        %v278 = vshrl.u32 %v277, 7
        %v279 = vsub.s32 6, %v278
        %v280 = vrot.slane %v208, %v279
        %v283 = vlaneseq
        %v284 = vshrl.u32 %v283, 7
        %v285 = vsub.s32 2, %v284
        %v286 = vrot.slane %v276, %v285
        %v287 = vlaneseq
        %v288 = vshrl.u32 %v287, 7
        %v289 = vsub.s32 2, %v288
        %v290 = vrot.slane %v280, %v289
        %v291 = vmul.f32 %v271, %v286
        %v292 = vmul.f32 %v271, %v290
        %v293 = vadd.f32 %v267, %v291
        %v294 = vadd.f32 %v268, %v292
        %295 = vset.pattern.permute.xlu0 3
        %296 = vperm.xlu0 %295, %v207
        %v297 = vpop.permute.xlu0 %296
        %v299 = vlaneseq
        %v300 = vshrl.u32 %v299, 7
        %v301 = vsub.s32 3, %v300
        %v302 = vrot.slane %v208, %v301
        %v303 = vlaneseq
        %v304 = vshrl.u32 %v303, 7
        %v305 = vsub.s32 7, %v304
        %v306 = vrot.slane %v208, %v305
        %v309 = vlaneseq
        %v310 = vshrl.u32 %v309, 7
        %v311 = vsub.s32 3, %v310
        %v312 = vrot.slane %v302, %v311
        %v313 = vlaneseq
        %v314 = vshrl.u32 %v313, 7
        %v315 = vsub.s32 3, %v314
        %v316 = vrot.slane %v306, %v315
        %v317 = vmul.f32 %v297, %v312
        %v318 = vmul.f32 %v297, %v316
        %v319 = vadd.f32 %v293, %v317
        %v320 = vadd.f32 %v294, %v318
        %v323 = vcombine.low %v319, %v320
        %325 = vst [vmem:[%s204] sm:$0xff] %v323
        %s326 = sand.u32 %s112, 1
        %s327 = scalar_lea.sflag [#allocation4], %s326
        %s328 = sand.u32 %s112, 1
        %s329 = smul.addr %s328, 8
        %s330 = scalar_lea.vmem [#allocation5], %s329
        // Predicated region
        $region37: #{tpu_custom_call.1} parent=31 // pred_check
          %p331 = pneg %p122
        $region38: #{tpu_custom_call.1} parent=31 // pred_check_branch
          %333 = sbr.rel (%p331) target = $region40
        $region39: #{tpu_custom_call.1} parent=31 // pred_region
          %s334 = smul.u32 2, %s25
          %s336 = ssub.s32 128, 128
          %337 = vsyncadd %s327, %s336
          %s338 = smul.addr %s24, 2
          %s339 = sadd.s32 %s334, %s338
          %s340 = smul.addr %s339, 64
          %s341 = scalar_lea.hbm %s3, %s340
          %s343 = sshll.u32 %s330, 4
          %s344 = int_to_ptr.vmem [resolvable:$true] %s343
          %346 = dma.vmem_to_hbm [thread:$0]  %s344, 128, %s341, %s327
        $region40: #{tpu_custom_call.1} parent=31 // pred_fallthru
          _
      $region32: #{tpu_custom_call.1} parent=5 // pred_fallthru
        _
      %p347 = scmp.le.s32.totalorder 2, %s15
      // Predicated region
      $region41: #{tpu_custom_call.1} parent=5 // pred_check
        %p348 = pneg %p347
      $region42: #{tpu_custom_call.1} parent=5 // pred_check_branch
        %350 = sbr.rel (%p348) target = $region44
      $region43: #{tpu_custom_call.1} parent=5 // pred_region
        %s351 = ssub.s32 %s15, 2
        // Predicated region
        $region45: #{tpu_custom_call.1} parent=43 // pred_check
          %p352 = pneg %p128
        $region46: #{tpu_custom_call.1} parent=43 // pred_check_branch
          %354 = sbr.rel (%p352) target = $region48
        $region47: #{tpu_custom_call.1} parent=43 // pred_region
          %s355 = sand.u32 %s113, 1
          %s356 = scalar_lea.sflag [#allocation4], %s355
          %s357 = sand.u32 %s113, 1
          %s358 = smul.addr %s357, 8
          %s359 = scalar_lea.vmem [#allocation5], %s358
          %360 = dma.done %s356, 128
        $region48: #{tpu_custom_call.1} parent=43 // pred_fallthru
          _
      $region44: #{tpu_custom_call.1} parent=5 // pred_fallthru
        _
    $region6: #{tpu_custom_call.1} parent=1 // loop_footer
      %s19 = sadd.s32 1, %s15
    $region7: #{tpu_custom_call.1} parent=1 // loop_footer_branch
      %14 = sbr.rel target = $region3
    $region8: #{tpu_custom_call.1} parent=1 // loop_exit
      _
    %361 = vsyncpa [#allocation3], 1
    %s362 = scalar_lea.sflag [#allocation3], 1
    %363 = vsyncpa %s362, 1
    %364 = vsyncpa [#allocation4], 1
    %s365 = scalar_lea.sflag [#allocation4], 1
    %366 = vsyncpa %s365, 1

</llo_original>
